<compile_context>
chip_gen: v5e
topology: v5e:2x2
jax: 0.10.0
libtpu: 0.0.40
codegen_flags: <defaults>
</compile_context>

<pallas_src>
import functools

import jax
import jax.numpy as jnp
from jax.experimental import pallas as pl
from jax.experimental.pallas import tpu as pltpu


def _sigmoid(x):
    # exp lowers to the EUP; identical formula used in kernel and reference.
    return 1.0 / (1.0 + jnp.exp(-x))


def _path_choice_kernel(x_ref, wih_ref, whh_ref, bih_ref, bhh_ref,
                        wfc_ref, bfc_ref, out_ref, h_ref, *, seq_len, hidden):
    """Fused GRU (batch_first) -> sigmoid -> Linear for one batch tile.

    x_ref   : (T, TB, I)  time-major input tile (time on the cheap leading axis)
    wih_ref : (I, 3H)     transposed GRU input weights, gate order [r | z | n]
    whh_ref : (H, 3H)     transposed GRU hidden weights, gate order [r | z | n]
    bih_ref : (1, 3H)     GRU input bias
    bhh_ref : (1, 3H)     GRU hidden bias
    wfc_ref : (H, O)      transposed FC weight
    bfc_ref : (1, O)      FC bias
    out_ref : (T, TB, O)  path_cost output tile
    h_ref   : (TB, H)     f32 VMEM scratch carrying the recurrent hidden state
    """
    H = hidden

    # Upcast once in-kernel (inputs may be bf16); weights stay VMEM-resident.
    wih = wih_ref[...].astype(jnp.float32)
    whh = whh_ref[...].astype(jnp.float32)
    bih = bih_ref[...].astype(jnp.float32)
    bhh = bhh_ref[...].astype(jnp.float32)
    wfc = wfc_ref[...].astype(jnp.float32)
    bfc = bfc_ref[...].astype(jnp.float32)

    h_ref[...] = jnp.zeros_like(h_ref)

    @pl.loop(0, seq_len)
    def _(t):
        x_t = x_ref[t].astype(jnp.float32)            # (TB, I)
        h_prev = h_ref[...]                            # (TB, H)

        gx = jnp.dot(x_t, wih, preferred_element_type=jnp.float32) + bih      # (TB, 3H)
        gh = jnp.dot(h_prev, whh, preferred_element_type=jnp.float32) + bhh   # (TB, 3H)

        r = _sigmoid(gx[:, 0:H] + gh[:, 0:H])
        z = _sigmoid(gx[:, H:2 * H] + gh[:, H:2 * H])
        n = jnp.tanh(gx[:, 2 * H:3 * H] + r * gh[:, 2 * H:3 * H])
        h_new = (1.0 - z) * n + z * h_prev
        h_ref[...] = h_new

        gate = _sigmoid(h_new)                         # (TB, H)
        out_ref[t] = (
            jnp.dot(gate, wfc, preferred_element_type=jnp.float32) + bfc
        ).astype(out_ref.dtype)


def path_choice_decoder(x, w_ih, w_hh, b_ih, b_hh, w_fc, b_fc):
    """x: (B, T, input_size) -> path_cost: (B, T, output_size)."""
    B, T, I = x.shape
    H = w_hh.shape[1]
    O = w_fc.shape[0]

    # Time-major so the sequential recurrence indexes the cheap leading axis;
    # feature axes (I / 3H / H / O) stay lane-major.  Weights transposed once
    # here so the kernel never needs an in-kernel (XLU) transpose.
    x_tb = jnp.transpose(x, (1, 0, 2))                 # (T, B, I)
    wih_t = jnp.transpose(w_ih)                        # (I, 3H)
    whh_t = jnp.transpose(w_hh)                        # (H, 3H)
    wfc_t = jnp.transpose(w_fc)                        # (H, O)
    bih2 = b_ih.reshape(1, 3 * H)
    bhh2 = b_hh.reshape(1, 3 * H)
    bfc2 = b_fc.reshape(1, O)

    # Batch is the only parallel axis (the GRU recurrence is over time), so
    # the grid tiles batch and gets automatic double-buffered pipelining of
    # the x / out tiles.  Tiny test shapes -> full batch per tile.
    TB = B
    grid = (pl.cdiv(B, TB),)

    dtype_bytes = jnp.dtype(x.dtype).itemsize
    cost = pl.CostEstimate(
        flops=T * B * (2 * I * 3 * H + 2 * H * 3 * H + 2 * H * O + 12 * H),
        transcendentals=T * B * 4 * H,
        bytes_accessed=(x.size + w_ih.size + w_hh.size + b_ih.size
                        + b_hh.size + w_fc.size + b_fc.size
                        + B * T * O) * dtype_bytes,
    )

    out_tb = pl.pallas_call(
        functools.partial(_path_choice_kernel, seq_len=T, hidden=H),
        out_shape=jax.ShapeDtypeStruct((T, B, O), x.dtype),
        grid_spec=pltpu.PrefetchScalarGridSpec(
            num_scalar_prefetch=0,
            grid=grid,
            in_specs=[
                pl.BlockSpec((T, TB, I), lambda b: (0, b, 0)),
                pl.BlockSpec((I, 3 * H), lambda b: (0, 0)),
                pl.BlockSpec((H, 3 * H), lambda b: (0, 0)),
                pl.BlockSpec((1, 3 * H), lambda b: (0, 0)),
                pl.BlockSpec((1, 3 * H), lambda b: (0, 0)),
                pl.BlockSpec((H, O), lambda b: (0, 0)),
                pl.BlockSpec((1, O), lambda b: (0, 0)),
            ],
            out_specs=pl.BlockSpec((T, TB, O), lambda b: (0, b, 0)),
            scratch_shapes=[pltpu.VMEM((TB, H), jnp.float32)],
        ),
        compiler_params=pltpu.CompilerParams(
            dimension_semantics=("parallel",),   # batch tiles shard across TCs
            vmem_limit_bytes=32 * 1024 * 1024,   # safe on v5e/v6e/v7x
        ),
        cost_estimate=cost,
    )(x_tb, wih_t, whh_t, bih2, bhh2, wfc_t, bfc2)

    return jnp.transpose(out_tb, (1, 0, 2))            # (B, T, O)


def _reference(x, w_ih, w_hh, b_ih, b_hh, w_fc, b_fc):
    """Pure-JAX reference matching torch.nn.GRU(batch_first=True) semantics."""
    B, T, I = x.shape
    H = w_hh.shape[1]
    hp = jax.lax.Precision.HIGHEST
    xf = x.astype(jnp.float32)
    h = jnp.zeros((B, H), jnp.float32)
    outs = []
    for t in range(T):
        gx = jnp.dot(xf[:, t, :], w_ih.T, precision=hp) + b_ih
        gh = jnp.dot(h, w_hh.T, precision=hp) + b_hh
        r = _sigmoid(gx[:, :H] + gh[:, :H])
        z = _sigmoid(gx[:, H:2 * H] + gh[:, H:2 * H])
        n = jnp.tanh(gx[:, 2 * H:] + r * gh[:, 2 * H:])
        h = (1.0 - z) * n + z * h
        gate = _sigmoid(h)
        outs.append(jnp.dot(gate, w_fc.T, precision=hp) + b_fc)
    return jnp.stack(outs, axis=1).astype(x.dtype)      # (B, T, O)


if __name__ == "__main__":
    key = jax.random.PRNGKey(0)
    ks = jax.random.split(key, 7)
    B, T, I, H, O = 2, 8, 16, 32, 4   # batch, seq, input, hidden, output
    scale = 0.2

    x = jax.random.normal(ks[0], (B, T, I), jnp.float32)
    w_ih = scale * jax.random.normal(ks[1], (3 * H, I), jnp.float32)
    w_hh = scale * jax.random.normal(ks[2], (3 * H, H), jnp.float32)
    b_ih = scale * jax.random.normal(ks[3], (3 * H,), jnp.float32)
    b_hh = scale * jax.random.normal(ks[4], (3 * H,), jnp.float32)
    w_fc = scale * jax.random.normal(ks[5], (O, H), jnp.float32)
    b_fc = scale * jax.random.normal(ks[6], (O,), jnp.float32)

    out = path_choice_decoder(x, w_ih, w_hh, b_ih, b_hh, w_fc, b_fc)
    jax.block_until_ready(out)

    ref = _reference(x, w_ih, w_hh, b_ih, b_hh, w_fc, b_fc)
    assert out.shape == (B, T, O), out.shape
    assert jnp.allclose(out, ref, rtol=1e-4, atol=1e-4), float(
        jnp.max(jnp.abs(out - ref)))
    print("KERNEL_OK")
</pallas_src>

<mosaic_0001>
module attributes {stable_mosaic.version = 11 : i64} {
  func.func @_path_choice_kernel(%arg0: i32, %arg1: memref<8x2x16xf32, #tpu.memory_space<vmem>>, %arg2: memref<16x96xf32, #tpu.memory_space<vmem>>, %arg3: memref<32x96xf32, #tpu.memory_space<vmem>>, %arg4: memref<1x96xf32, #tpu.memory_space<vmem>>, %arg5: memref<1x96xf32, #tpu.memory_space<vmem>>, %arg6: memref<32x4xf32, #tpu.memory_space<vmem>>, %arg7: memref<1x4xf32, #tpu.memory_space<vmem>>, %arg8: memref<8x2x4xf32, #tpu.memory_space<vmem>>, %arg9: memref<2x32xf32, #tpu.memory_space<vmem>>) attributes {dimension_semantics = [#tpu.dimension_semantics<parallel>], iteration_bounds = array<i64: 1>, scalar_prefetch = 0 : i64, scratch_operands = 1 : i64, tpu.core_type = #tpu.core_type<tc>, window_params = [{transform_indices = @transform_0, window_bounds = array<i64: 8, 2, 16>}, {pipeline_mode = #tpu.pipeline_mode<synchronous>, transform_indices = @transform_1, window_bounds = array<i64: 16, 96>}, {pipeline_mode = #tpu.pipeline_mode<synchronous>, transform_indices = @transform_2, window_bounds = array<i64: 32, 96>}, {pipeline_mode = #tpu.pipeline_mode<synchronous>, transform_indices = @transform_3, window_bounds = array<i64: 1, 96>}, {pipeline_mode = #tpu.pipeline_mode<synchronous>, transform_indices = @transform_4, window_bounds = array<i64: 1, 96>}, {pipeline_mode = #tpu.pipeline_mode<synchronous>, transform_indices = @transform_5, window_bounds = array<i64: 32, 4>}, {pipeline_mode = #tpu.pipeline_mode<synchronous>, transform_indices = @transform_6, window_bounds = array<i64: 1, 4>}, {transform_indices = @transform_7, window_bounds = array<i64: 8, 2, 4>}]} {
    %c0 = arith.constant 0 : index
    %c0_0 = arith.constant 0 : index
    %0 = vector.load %arg2[%c0, %c0_0] : memref<16x96xf32, #tpu.memory_space<vmem>>, vector<16x96xf32>
    %c0_1 = arith.constant 0 : index
    %c0_2 = arith.constant 0 : index
    %1 = vector.load %arg3[%c0_1, %c0_2] : memref<32x96xf32, #tpu.memory_space<vmem>>, vector<32x96xf32>
    %c0_3 = arith.constant 0 : index
    %c0_4 = arith.constant 0 : index
    %2 = vector.load %arg4[%c0_3, %c0_4] : memref<1x96xf32, #tpu.memory_space<vmem>>, vector<1x96xf32>
    %c0_5 = arith.constant 0 : index
    %c0_6 = arith.constant 0 : index
    %3 = vector.load %arg5[%c0_5, %c0_6] : memref<1x96xf32, #tpu.memory_space<vmem>>, vector<1x96xf32>
    %c0_7 = arith.constant 0 : index
    %c0_8 = arith.constant 0 : index
    %4 = vector.load %arg6[%c0_7, %c0_8] : memref<32x4xf32, #tpu.memory_space<vmem>>, vector<32x4xf32>
    %c0_9 = arith.constant 0 : index
    %c0_10 = arith.constant 0 : index
    %5 = vector.load %arg7[%c0_9, %c0_10] : memref<1x4xf32, #tpu.memory_space<vmem>>, vector<1x4xf32>
    %cst = arith.constant 0.000000e+00 : f32
    %6 = vector.broadcast %cst : f32 to vector<2x32xf32>
    %c0_11 = arith.constant 0 : index
    %c0_12 = arith.constant 0 : index
    %7 = vector.load %arg9[%c0_11, %c0_12] : memref<2x32xf32, #tpu.memory_space<vmem>>, vector<2x32xf32>
    tpu.vector_store %arg9[%c0_11, %c0_12], %6 {strides = array<i32>} : memref<2x32xf32, #tpu.memory_space<vmem>>, vector<2x32xf32>,
    %c0_i32 = arith.constant 0 : i32
    %c8_i32 = arith.constant 8 : i32
    %8 = arith.addi %c0_i32, %c8_i32 : i32
    %c1_i32 = arith.constant 1 : i32
    scf.for %arg10 = %c0_i32 to %8 step %c1_i32  : i32 {
      %c1_i32_14 = arith.constant 1 : i32
      %9 = arith.muli %arg10, %c1_i32_14 : i32
      %c0_i32_15 = arith.constant 0 : i32
      %10 = arith.addi %c0_i32_15, %9 : i32
      %11 = arith.index_cast %10 : i32 to index
      %c0_16 = arith.constant 0 : index
      %c0_17 = arith.constant 0 : index
      %12 = vector.load %arg1[%11, %c0_16, %c0_17] : memref<8x2x16xf32, #tpu.memory_space<vmem>>, vector<1x2x16xf32>
      %13 = vector.shape_cast %12 : vector<1x2x16xf32> to vector<2x16xf32>
      %c0_18 = arith.constant 0 : index
      %c0_19 = arith.constant 0 : index
      %14 = vector.load %arg9[%c0_18, %c0_19] : memref<2x32xf32, #tpu.memory_space<vmem>>, vector<2x32xf32>
      %cst_20 = arith.constant dense<0.000000e+00> : vector<2x96xf32>
      %15 = tpu.matmul %13, %0, %cst_20 {dimension_numbers = #tpu.dot_dimension_numbers<[1], [0], [0], [1], [0, 0, 1, 1], [], []>} : vector<2x16xf32>, vector<16x96xf32>, vector<2x96xf32> -> vector<2x96xf32>
      %16 = vector.broadcast %2 : vector<1x96xf32> to vector<2x96xf32>
      %17 = arith.addf %15, %16 : vector<2x96xf32>
      %cst_21 = arith.constant dense<0.000000e+00> : vector<2x96xf32>
      %18 = tpu.matmul %14, %1, %cst_21 {dimension_numbers = #tpu.dot_dimension_numbers<[1], [0], [0], [1], [0, 0, 1, 1], [], []>} : vector<2x32xf32>, vector<32x96xf32>, vector<2x96xf32> -> vector<2x96xf32>
      %19 = vector.broadcast %3 : vector<1x96xf32> to vector<2x96xf32>
      %20 = arith.addf %18, %19 : vector<2x96xf32>
      %21 = vector.extract_strided_slice %17 {offsets = [0, 0], sizes = [2, 32], strides = [1, 1]} : vector<2x96xf32> to vector<2x32xf32>
      %22 = vector.extract_strided_slice %20 {offsets = [0, 0], sizes = [2, 32], strides = [1, 1]} : vector<2x96xf32> to vector<2x32xf32>
      %23 = arith.addf %21, %22 : vector<2x32xf32>
      %cst_22 = arith.constant 0.000000e+00 : f32
      %24 = vector.broadcast %cst_22 : f32 to vector<2x32xf32>
      %25 = arith.subf %24, %23 : vector<2x32xf32>
      %26 = math.exp %25 : vector<2x32xf32>
      %cst_23 = arith.constant 1.000000e+00 : f32
      %27 = vector.broadcast %cst_23 : f32 to vector<2x32xf32>
      %28 = arith.addf %27, %26 : vector<2x32xf32>
      %cst_24 = arith.constant 1.000000e+00 : f32
      %29 = vector.broadcast %cst_24 : f32 to vector<2x32xf32>
      %30 = arith.divf %29, %28 : vector<2x32xf32>
      %31 = vector.extract_strided_slice %17 {offsets = [0, 32], sizes = [2, 32], strides = [1, 1]} : vector<2x96xf32> to vector<2x32xf32>
      %32 = vector.extract_strided_slice %20 {offsets = [0, 32], sizes = [2, 32], strides = [1, 1]} : vector<2x96xf32> to vector<2x32xf32>
      %33 = arith.addf %31, %32 : vector<2x32xf32>
      %cst_25 = arith.constant 0.000000e+00 : f32
      %34 = vector.broadcast %cst_25 : f32 to vector<2x32xf32>
      %35 = arith.subf %34, %33 : vector<2x32xf32>
      %36 = math.exp %35 : vector<2x32xf32>
      %cst_26 = arith.constant 1.000000e+00 : f32
      %37 = vector.broadcast %cst_26 : f32 to vector<2x32xf32>
      %38 = arith.addf %37, %36 : vector<2x32xf32>
      %cst_27 = arith.constant 1.000000e+00 : f32
      %39 = vector.broadcast %cst_27 : f32 to vector<2x32xf32>
      %40 = arith.divf %39, %38 : vector<2x32xf32>
      %41 = vector.extract_strided_slice %17 {offsets = [0, 64], sizes = [2, 32], strides = [1, 1]} : vector<2x96xf32> to vector<2x32xf32>
      %42 = vector.extract_strided_slice %20 {offsets = [0, 64], sizes = [2, 32], strides = [1, 1]} : vector<2x96xf32> to vector<2x32xf32>
      %43 = arith.mulf %30, %42 : vector<2x32xf32>
      %44 = arith.addf %41, %43 : vector<2x32xf32>
      %45 = math.tanh %44 : vector<2x32xf32>
      %cst_28 = arith.constant 1.000000e+00 : f32
      %46 = vector.broadcast %cst_28 : f32 to vector<2x32xf32>
      %47 = arith.subf %46, %40 : vector<2x32xf32>
      %48 = arith.mulf %47, %45 : vector<2x32xf32>
      %49 = arith.mulf %40, %14 : vector<2x32xf32>
      %50 = arith.addf %48, %49 : vector<2x32xf32>
      %c0_29 = arith.constant 0 : index
      %c0_30 = arith.constant 0 : index
      %51 = vector.load %arg9[%c0_29, %c0_30] : memref<2x32xf32, #tpu.memory_space<vmem>>, vector<2x32xf32>
      tpu.vector_store %arg9[%c0_29, %c0_30], %50 {strides = array<i32>} : memref<2x32xf32, #tpu.memory_space<vmem>>, vector<2x32xf32>,
      %cst_31 = arith.constant 0.000000e+00 : f32
      %52 = vector.broadcast %cst_31 : f32 to vector<2x32xf32>
      %53 = arith.subf %52, %50 : vector<2x32xf32>
      %54 = math.exp %53 : vector<2x32xf32>
      %cst_32 = arith.constant 1.000000e+00 : f32
      %55 = vector.broadcast %cst_32 : f32 to vector<2x32xf32>
      %56 = arith.addf %55, %54 : vector<2x32xf32>
      %cst_33 = arith.constant 1.000000e+00 : f32
      %57 = vector.broadcast %cst_33 : f32 to vector<2x32xf32>
      %58 = arith.divf %57, %56 : vector<2x32xf32>
      %cst_34 = arith.constant dense<0.000000e+00> : vector<2x4xf32>
      %59 = tpu.matmul %58, %4, %cst_34 {dimension_numbers = #tpu.dot_dimension_numbers<[1], [0], [0], [1], [0, 0, 1, 1], [], []>} : vector<2x32xf32>, vector<32x4xf32>, vector<2x4xf32> -> vector<2x4xf32>
      %60 = vector.broadcast %5 : vector<1x4xf32> to vector<2x4xf32>
      %61 = arith.addf %59, %60 : vector<2x4xf32>
      %62 = arith.index_cast %10 : i32 to index
      %c0_35 = arith.constant 0 : index
      %c0_36 = arith.constant 0 : index
      %63 = vector.load %arg8[%62, %c0_35, %c0_36] : memref<8x2x4xf32, #tpu.memory_space<vmem>>, vector<1x2x4xf32>
      %64 = vector.shape_cast %63 : vector<1x2x4xf32> to vector<2x4xf32>
      %65 = vector.shape_cast %61 : vector<2x4xf32> to vector<1x2x4xf32>
      tpu.vector_store %arg8[%62, %c0_35, %c0_36], %65 {strides = array<i32>} : memref<8x2x4xf32, #tpu.memory_space<vmem>>, vector<1x2x4xf32>,
    }
    %c8_i32_13 = arith.constant 8 : i32
    return
  }
  func.func @transform_0(%arg0: i32) -> (i32, i32, i32) {
    %c0_i32 = arith.constant 0 : i32
    %c0_i32_0 = arith.constant 0 : i32
    %c0_i32_1 = arith.constant 0 : i32
    return %c0_i32, %arg0, %c0_i32_0 : i32, i32, i32
  }
  func.func @transform_1(%arg0: i32) -> (i32, i32) {
    %c0_i32 = arith.constant 0 : i32
    %c0_i32_0 = arith.constant 0 : i32
    %c0_i32_1 = arith.constant 0 : i32
    return %c0_i32, %c0_i32_0 : i32, i32
  }
  func.func @transform_2(%arg0: i32) -> (i32, i32) {
    %c0_i32 = arith.constant 0 : i32
    %c0_i32_0 = arith.constant 0 : i32
    %c0_i32_1 = arith.constant 0 : i32
    return %c0_i32, %c0_i32_0 : i32, i32
  }
  func.func @transform_3(%arg0: i32) -> (i32, i32) {
    %c0_i32 = arith.constant 0 : i32
    %c0_i32_0 = arith.constant 0 : i32
    %c0_i32_1 = arith.constant 0 : i32
    return %c0_i32, %c0_i32_0 : i32, i32
  }
  func.func @transform_4(%arg0: i32) -> (i32, i32) {
    %c0_i32 = arith.constant 0 : i32
    %c0_i32_0 = arith.constant 0 : i32
    %c0_i32_1 = arith.constant 0 : i32
    return %c0_i32, %c0_i32_0 : i32, i32
  }
  func.func @transform_5(%arg0: i32) -> (i32, i32) {
    %c0_i32 = arith.constant 0 : i32
    %c0_i32_0 = arith.constant 0 : i32
    %c0_i32_1 = arith.constant 0 : i32
    return %c0_i32, %c0_i32_0 : i32, i32
  }
  func.func @transform_6(%arg0: i32) -> (i32, i32) {
    %c0_i32 = arith.constant 0 : i32
    %c0_i32_0 = arith.constant 0 : i32
    %c0_i32_1 = arith.constant 0 : i32
    return %c0_i32, %c0_i32_0 : i32, i32
  }
  func.func @transform_7(%arg0: i32) -> (i32, i32, i32) {
    %c0_i32 = arith.constant 0 : i32
    %c0_i32_0 = arith.constant 0 : i32
    %c0_i32_1 = arith.constant 0 : i32
    return %c0_i32, %arg0, %c0_i32_0 : i32, i32, i32
  }
}

</mosaic_0001>

<llo_original>
// kernel: tpu_custom_call.1
$region0: #{tpu_custom_call.1}
  #allocation0 [shape = 'u32[]', space=smem, size = 0x4, offset = 0x4, fixed_abs, tag = 'smem constant byte address 0x4 - core index']
  #allocation1 [shape = 'u32[72,128]{1,0:T(1,128)}', space=vmem, size = 0x9000, scoped, tag = 'internal scratch']
  #allocation2 [shape = 'f32[2,32]{1,0:T(2,128)}', space=vmem, size = 0x400, scoped, tag = 'scratch operand']
  %s0 = inlined_call_operand.hbm [shape: f32[8,2,16], index: 0, kind: input, shape index: {}]
  %s1 = inlined_call_operand.hbm [shape: f32[16,96], index: 1, kind: input, shape index: {}]
  %s2 = inlined_call_operand.vmem [shape: f32[32,96], index: 2, kind: input, shape index: {}]
  %s3 = inlined_call_operand.vmem [shape: f32[1,96], index: 3, kind: input, shape index: {}]
  %s4 = inlined_call_operand.vmem [shape: f32[1,96], index: 4, kind: input, shape index: {}]
  %s5 = inlined_call_operand.vmem [shape: f32[32,4], index: 5, kind: input, shape index: {}]
  %s6 = inlined_call_operand.vmem [shape: f32[1,4], index: 6, kind: input, shape index: {}]
  %s7 = inlined_call_operand.vmem [shape: f32[8,2,4], index: 7, kind: output, shape index: {}]
  %s8 = sld [smem:[#allocation0]]
  $region53: #{tpu_custom_call.1} parent=0
    _
  %s10 = ssub.s32 1, %s8
  %s11 = scalar_select 0, %s10, %s8
  $region1: #{tpu_custom_call.1} parent=0
    #allocation3 [shape = 'u8[8192]{0}', space=vmem, size = 0x2000, scoped, tag = 'input window, operand 0, single buffered']
    #allocation4 [shape = 's32[1]{0}', space=sflag, size = 0x4, scoped, tag = 'scoped memory for tpu_custom_call.1']
    #allocation5 [shape = 'u8[8192]{0}', space=vmem, size = 0x2000, scoped, tag = 'input window, operand 1, single buffered']
    #allocation6 [shape = 's32[1]{0}', space=sflag, size = 0x4, scoped, tag = 'scoped memory for tpu_custom_call.1']
    %12 = vsyncpa [#allocation4], 0
    %13 = vsyncpa [#allocation6], 0
    // Predicated region
    $region2: #{tpu_custom_call.1} parent=1 // pred_check
      _
    $region3: #{tpu_custom_call.1} parent=1 // pred_check_branch
      %15 = sbr.rel (0) target = $region5
    $region4: #{tpu_custom_call.1} parent=1 // pred_region
      %17 = vsyncadd [#allocation4], 0
      %s18 = sshll.u32 %s0, 4
      %s19 = int_to_ptr.hbm [resolvable:$true] %s18
      %s20 = sshll.u32 [#allocation3], 4
      %s21 = int_to_ptr.vmem [resolvable:$true] %s20
      %26 = dma.hbm_to_vmem [thread:$0]  %s19, 256, %s21, [#allocation4], 32, 32, 2
    $region5: #{tpu_custom_call.1} parent=1 // pred_fallthru
      _
    // Predicated region
    $region6: #{tpu_custom_call.1} parent=1 // pred_check
      _
    $region7: #{tpu_custom_call.1} parent=1 // pred_check_branch
      %28 = sbr.rel (0) target = $region9
    $region8: #{tpu_custom_call.1} parent=1 // pred_region
      %30 = vsyncadd [#allocation6], 0
      %s31 = sshll.u32 %s1, 4
      %s32 = int_to_ptr.hbm [resolvable:$true] %s31
      %s33 = sshll.u32 [#allocation5], 4
      %s34 = int_to_ptr.vmem [resolvable:$true] %s33
      %39 = dma.hbm_to_vmem [thread:$0]  %s32, 256, %s34, [#allocation6], 128, 128, 8
    $region9: #{tpu_custom_call.1} parent=1 // pred_fallthru
      _
    // Predicated region
    $region10: #{tpu_custom_call.1} parent=1 // pred_check
      _
    $region11: #{tpu_custom_call.1} parent=1 // pred_check_branch
      %41 = sbr.rel (0) target = $region13
    $region12: #{tpu_custom_call.1} parent=1 // pred_region
      _
    $region13: #{tpu_custom_call.1} parent=1 // pred_fallthru
      _
    // Predicated region
    $region14: #{tpu_custom_call.1} parent=1 // pred_check
      _
    $region15: #{tpu_custom_call.1} parent=1 // pred_check_branch
      %43 = sbr.rel (0) target = $region17
    $region16: #{tpu_custom_call.1} parent=1 // pred_region
      _
    $region17: #{tpu_custom_call.1} parent=1 // pred_fallthru
      _
    // Predicated region
    $region18: #{tpu_custom_call.1} parent=1 // pred_check
      _
    $region19: #{tpu_custom_call.1} parent=1 // pred_check_branch
      %45 = sbr.rel (0) target = $region21
    $region20: #{tpu_custom_call.1} parent=1 // pred_region
      _
    $region21: #{tpu_custom_call.1} parent=1 // pred_fallthru
      _
    // Predicated region
    $region22: #{tpu_custom_call.1} parent=1 // pred_check
      _
    $region23: #{tpu_custom_call.1} parent=1 // pred_check_branch
      %47 = sbr.rel (0) target = $region25
    $region24: #{tpu_custom_call.1} parent=1 // pred_region
      _
    $region25: #{tpu_custom_call.1} parent=1 // pred_fallthru
      _
    // Predicated region
    $region26: #{tpu_custom_call.1} parent=1 // pred_check
      _
    $region27: #{tpu_custom_call.1} parent=1 // pred_check_branch
      %49 = sbr.rel (0) target = $region29
    $region28: #{tpu_custom_call.1} parent=1 // pred_region
      _
    $region29: #{tpu_custom_call.1} parent=1 // pred_fallthru
      _
    // Predicated region
    $region30: #{tpu_custom_call.1} parent=1 // pred_check
      _
    $region31: #{tpu_custom_call.1} parent=1 // pred_check_branch
      %51 = sbr.rel (0) target = $region33
    $region32: #{tpu_custom_call.1} parent=1 // pred_region
      %53 = dma.done [#allocation4], 256
    $region33: #{tpu_custom_call.1} parent=1 // pred_fallthru
      _
    // Predicated region
    $region34: #{tpu_custom_call.1} parent=1 // pred_check
      _
    $region35: #{tpu_custom_call.1} parent=1 // pred_check_branch
      %55 = sbr.rel (0) target = $region37
    $region36: #{tpu_custom_call.1} parent=1 // pred_region
      %57 = dma.done [#allocation6], 256
    $region37: #{tpu_custom_call.1} parent=1 // pred_fallthru
      _
    %v58 = vld [vmem:[#allocation5] sm:$0xff]
    %v59 = vld [vmem:[#allocation5 + $0x8] sm:$0xff]
    %v60 = vld [vmem:[%s2] sm:$0xff]
    %v61 = vld [vmem:[%s2 + $0x8] sm:$0xff]
    %v62 = vld [vmem:[%s2 + $0x10] sm:$0xff]
    %v63 = vld [vmem:[%s2 + $0x18] sm:$0xff]
    %v64 = vld [vmem:[%s3] sm:$0x1]
    %v65 = vld [vmem:[%s4] sm:$0x1]
    %v66 = vld [vmem:[%s5] sm:$0xff]
    %v67 = vld [vmem:[%s5 + $0x8] sm:$0xff]
    %v68 = vld [vmem:[%s5 + $0x10] sm:$0xff]
    %v69 = vld [vmem:[%s5 + $0x18] sm:$0xff]
    %v70 = vld [vmem:[%s6] sm:$0x1]
    %vm71 = vcmask 254976
    %72 = vst.msk [vmem:[#allocation2] sm:$0x3] %vm71, 0.0
    loop: start=0, step=1, limit=8
    $region38: #{tpu_custom_call.1} parent=1 // loop_pre_header
      _
    $region39: #{tpu_custom_call.1} parent=1 // loop_header
      %s74 = sphi 0, %s78
      %p75 = scmp.ge.s32.totalorder %s74, 8
    $region40: #{tpu_custom_call.1} parent=1 // loop_header_branch
      %77 = sbr.rel (%p75) target = $region44
    $region41: #{tpu_custom_call.1} parent=1 // loop_body
      %s79 = smul.u32 %s74, 2
      %s80 = scalar_lea.vmem [#allocation3], %s79
      %v81 = vld [vmem:[%s80] sm:$0x3]
      %v82 = vld [vmem:[#allocation2] sm:$0x3]
      %v84 = vperm.slane %v64, 0
      %vm86 = vcmask 130048
      %v88 = vsel %vm86, %v81, 0
      %90 = vmatpush.msra.mxu0 0.0
      %91 = vmatpush.msra.mxu0 0.0
      %92 = vmatpush.msra.mxu0 0.0
      %93 = vmatpush.msra.mxu0 0.0
      %94 = vmatpush.msra.mxu0 0.0
      %95 = vmatpush.msra.mxu0 0.0
      %96 = vmatpush.msra.mxu0 0.0
      %97 = vmatpush.msra.mxu0 0.0
      %98 = vmatpush.msra.mxu0 0.0
      %99 = vmatpush.msra.mxu0 0.0
      %100 = vmatpush.msra.mxu0 0.0
      %101 = vmatpush.msra.mxu0 0.0
      %102 = vmatpush.msra.mxu0 0.0
      %103 = vmatpush.msra.mxu0 0.0
      %104 = vmatpush.msra.mxu0 %v59
      %105 = vmatpush.msra.mxu0 %v58
      %106 = vmatmul.f32.gmra.mxu0 %v88
      %v107 = vpop.f32.mrf.mxu0
      %v108 = vadd.f32 %v84, %v107
      %109 = vdwg.mxu0
      %v111 = vperm.slane %v65, 0
      %vm113 = vcmask 261120
      %v115 = vsel %vm113, %v82, 0
      %117 = vmatpush.msra.mxu0 0.0
      %118 = vmatpush.msra.mxu0 0.0
      %119 = vmatpush.msra.mxu0 0.0
      %120 = vmatpush.msra.mxu0 0.0
      %121 = vmatpush.msra.mxu0 0.0
      %122 = vmatpush.msra.mxu0 0.0
      %123 = vmatpush.msra.mxu0 0.0
      %124 = vmatpush.msra.mxu0 0.0
      %125 = vmatpush.msra.mxu0 0.0
      %126 = vmatpush.msra.mxu0 0.0
      %127 = vmatpush.msra.mxu0 0.0
      %128 = vmatpush.msra.mxu0 0.0
      %129 = vmatpush.msra.mxu0 %v63
      %130 = vmatpush.msra.mxu0 %v62
      %131 = vmatpush.msra.mxu0 %v61
      %132 = vmatpush.msra.mxu0 %v60
      %133 = vmatmul.f32.gmra.mxu0 %v115
      %v134 = vpop.f32.mrf.mxu0
      %v135 = vadd.f32 %v111, %v134
      %136 = vdwg.mxu0
      %v137 = vadd.f32 %v108, %v135
      %v138 = vsub.f32 0.0, %v137
      %v139 = vmul.f32 %v138, 1.442695
      %v140 = vpow.pop %v139
      %v141 = vadd.f32 %v140, 1.0
      %v142 = vrcp.pop %v141
      %v143 = vmul.f32 %v141, %v142
      %v144 = vsub.f32 1.0, %v143
      %v145 = vmul.f32 %v142, %v144
      %v146 = vadd.f32 %v142, %v145
      %vm147 = vweird.f32 %v141
      %vm148 = vweird.f32 %v142
      %vm149 = vmor %vm147, %vm148
      %v150 = vsel %vm149, %v142, %v146
      %v151 = vand.u32 2147483647, %v141
      %vm152 = vcmp.eq.f32.partialorder %v151, 8.507059e+37
      %v153 = vand.u32 %v141, 2147483648
      %v154 = vor.u32 1.1754944e-38, %v153
      %v155 = vsel %vm152, %v154, %v150
      %v156 = vmul.f32 1.0, %v155
      %158 = vrot.lane.b32.xlu0 %v135, 64
      %v159 = vpop.permute.xlu0 %158
      %v161 = vmul.f32 %v156, %v159
      %163 = vrot.lane.b32.xlu0 %v161, 64
      %v164 = vpop.permute.xlu0 %163
      %v166 = vadd.f32 %v108, %v164
      %v167 = vtanh.pop %v166
      %v168 = vsub.f32 1.0, %v156
      %170 = vrot.lane.b32.xlu0 %v167, 96
      %v171 = vpop.permute.xlu0 %170
      %v173 = vmul.f32 %v168, %v171
      %174 = vrot.lane.b32.xlu0 %v82, 32
      %v175 = vpop.permute.xlu0 %174
      %v177 = vmul.f32 %v156, %v175
      %v178 = vadd.f32 %v173, %v177
      %180 = vrot.lane.b32.xlu0 %v178, 96
      %v181 = vpop.permute.xlu0 %180
      %183 = vst.msk [vmem:[#allocation2] sm:$0x3] %vm71, %v181
      %v184 = vsub.f32 0.0, %v178
      %v185 = vmul.f32 %v184, 1.442695
      %v186 = vpow.pop %v185
      %v187 = vadd.f32 %v186, 1.0
      %v188 = vrcp.pop %v187
      %v189 = vmul.f32 %v187, %v188
      %v190 = vsub.f32 1.0, %v189
      %v191 = vmul.f32 %v188, %v190
      %v192 = vadd.f32 %v188, %v191
      %vm193 = vweird.f32 %v187
      %vm194 = vweird.f32 %v188
      %vm195 = vmor %vm193, %vm194
      %v196 = vsel %vm195, %v188, %v192
      %v197 = vand.u32 2147483647, %v187
      %vm198 = vcmp.eq.f32.partialorder %v197, 8.507059e+37
      %v199 = vand.u32 %v187, 2147483648
      %v200 = vor.u32 1.1754944e-38, %v199
      %v201 = vsel %vm198, %v200, %v196
      %v202 = vmul.f32 1.0, %v201
      %v204 = vperm.slane %v70, 0
      %207 = vrot.lane.b32.xlu0 %v202, 96
      %v208 = vpop.permute.xlu0 %207
      %v209 = vsel %vm113, %v208, 0
      %211 = vmatpush.msra.mxu0 0.0
      %212 = vmatpush.msra.mxu0 0.0
      %213 = vmatpush.msra.mxu0 0.0
      %214 = vmatpush.msra.mxu0 0.0
      %215 = vmatpush.msra.mxu0 0.0
      %216 = vmatpush.msra.mxu0 0.0
      %217 = vmatpush.msra.mxu0 0.0
      %218 = vmatpush.msra.mxu0 0.0
      %219 = vmatpush.msra.mxu0 0.0
      %220 = vmatpush.msra.mxu0 0.0
      %221 = vmatpush.msra.mxu0 0.0
      %222 = vmatpush.msra.mxu0 0.0
      %223 = vmatpush.msra.mxu0 %v69
      %224 = vmatpush.msra.mxu0 %v68
      %225 = vmatpush.msra.mxu0 %v67
      %226 = vmatpush.msra.mxu0 %v66
      %227 = vmatmul.f32.gmra.mxu0 %v209
      %v228 = vpop.f32.mrf.mxu0
      %v229 = vadd.f32 %v204, %v228
      %230 = vdwg.mxu0
      %s231 = scalar_lea.vmem %s7, %s79
      %vm232 = vcmask 25600
      %233 = vst.msk [vmem:[%s231] sm:$0x3] %vm232, %v229
    $region42: #{tpu_custom_call.1} parent=1 // loop_footer
      %s78 = sadd.s32 1, %s74
    $region43: #{tpu_custom_call.1} parent=1 // loop_footer_branch
      %73 = sbr.rel target = $region39
    $region44: #{tpu_custom_call.1} parent=1 // loop_exit
      _
    // Predicated region
    $region45: #{tpu_custom_call.1} parent=1 // pred_check
      _
    $region46: #{tpu_custom_call.1} parent=1 // pred_check_branch
      %235 = sbr.rel (0) target = $region48
    $region47: #{tpu_custom_call.1} parent=1 // pred_region
      _
    $region48: #{tpu_custom_call.1} parent=1 // pred_fallthru
      _
    // Predicated region
    $region49: #{tpu_custom_call.1} parent=1 // pred_check
      _
    $region50: #{tpu_custom_call.1} parent=1 // pred_check_branch
      %237 = sbr.rel (0) target = $region52
    $region51: #{tpu_custom_call.1} parent=1 // pred_region
      _
    $region52: #{tpu_custom_call.1} parent=1 // pred_fallthru
      _
    %238 = vsyncpa [#allocation4], 1
    %239 = vsyncpa [#allocation6], 1

</llo_original>
